<compile_context>
chip_gen: v7x
topology: tpu7x:2x2x1
jax: 0.10.0
libtpu: 0.0.40
codegen_flags: <defaults>
</compile_context>

<pallas_src>
import jax
import jax.numpy as jnp
from jax.experimental import pallas as pl
from jax.experimental.pallas import tpu as pltpu


def _attention_kernel(x_ref, w_ref, b_ref, ctx_ref, attw_ref):
    """One grid step handles TB batch elements.

    x_ref   : (TB, S, H) VMEM tile of lstm_output (activation dtype)
    w_ref   : (1, H)     attention weight row (activation dtype)
    b_ref   : (1, 1)     attention bias, SMEM scalar, f32
    ctx_ref : (TB, H)    context-vector output tile (lane-dense)
    attw_ref: (TB, S)    attention-weights output tile (lane-dense)
    """
    x = x_ref[...]                                    # (TB, S, H), no f32 copy
    w = w_ref[...][None, :, :]                        # (1, 1, H), same dtype as x
    b = b_ref[0, 0]                                   # f32 scalar

    # attention_scores = x @ w^T + b.  Multiply in the activation dtype on the
    # VPU, lane-reduce over H accumulating in f32, and keep the result in the
    # (TB, S, 1) sublane layout so it already matches x's (S on sublanes).
    scores = jnp.sum(x * w, axis=-1, keepdims=True, dtype=jnp.float32) + b  # (TB,S,1)

    # softmax over the sequence axis -- all on the small (TB, S, 1) slab.
    m = jnp.max(scores, axis=1, keepdims=True)        # (TB, 1, 1)
    e = jnp.exp(scores - m)                           # (TB, S, 1)
    denom = jnp.sum(e, axis=1, keepdims=True)         # (TB, 1, 1)
    weights = e / denom                               # exact softmax (sums to 1)

    # context_vector = sum_s lstm_output * weights: multiply in the activation
    # dtype (weights cast is a tiny slab), accumulate the S-reduction in f32.
    ctx = jnp.sum(x * weights.astype(x.dtype), axis=1, dtype=jnp.float32)   # (TB, H)

    ctx_ref[...] = ctx.astype(ctx_ref.dtype)
    # Single small relayout: (TB, S, 1) sublane weights -> (TB, S) lane-dense.
    attw_ref[...] = weights[:, :, 0].astype(attw_ref.dtype)


def _choose_batch_tile(B, S, H, itemsize, target_bytes=2 * 1024 * 1024):
    """Largest legal batch tile whose input slab is <= target_bytes.

    Legal tiles: divisors of B that are multiples of 8 (sublane rule for the
    2-D output blocks), plus B itself (block dim == full array dim).  Prefers
    tiles that leave an even number of grid steps >= 4 (balanced 2-TensorCore
    split on v7x plus pipelining), then >= 2 steps.  ~2 MiB slabs keep the
    double-buffered working set inside every generation's scoped-VMEM default.
    """
    per_batch = max(S * H * itemsize, 1)
    cap = max(1, target_bytes // per_batch)
    candidates = sorted({B} | {tb for tb in range(8, B, 8) if B % tb == 0})
    fitting = [tb for tb in candidates if tb <= cap] or [min(candidates)]

    def steps(tb):
        return B // tb

    even_ge4 = [tb for tb in fitting if steps(tb) >= 4 and steps(tb) % 2 == 0]
    if even_ge4:
        return max(even_ge4)
    ge2 = [tb for tb in fitting if steps(tb) >= 2]
    if ge2:
        return max(ge2)
    return max(fitting)


def attention_forward(lstm_output, weight, bias):
    """lstm_output: (B, S, H); weight: (1, H) (PyTorch Linear layout); bias: (1,).

    Returns (context_vector (B, H), attention_weights (B, S, 1)).
    """
    B, S, H = lstm_output.shape
    dtype = lstm_output.dtype

    # Weight row in the activation dtype (multiplies happen in that dtype; the
    # kernel's reductions still accumulate in f32).  Bias is an f32 SMEM scalar.
    w_row = weight.reshape(1, H).astype(dtype)
    b_smem = bias.reshape(1, 1).astype(jnp.float32)

    # Pad the batch up to a multiple of 8 when that unlocks a tiled grid
    # (awkward batch sizes otherwise force a single-step grid: no pipelining,
    # no megacore split).  Padded rows are zeros (softmax stays well defined)
    # and are sliced off afterwards.
    B_pad = B
    if B > 8 and B % 8 != 0:
        B_pad = ((B + 7) // 8) * 8
    x = lstm_output
    if B_pad != B:
        x = jnp.pad(lstm_output, ((0, B_pad - B), (0, 0), (0, 0)))

    TB = _choose_batch_tile(B_pad, S, H, jnp.dtype(dtype).itemsize)

    grid_spec = pltpu.PrefetchScalarGridSpec(
        num_scalar_prefetch=0,
        grid=(B_pad // TB,),
        in_specs=[
            pl.BlockSpec((TB, S, H), lambda b: (b, 0, 0)),       # activations
            pl.BlockSpec((1, H), lambda b: (0, 0)),              # weight row (grid-invariant)
            pl.BlockSpec(memory_space=pltpu.MemorySpace.SMEM),   # bias scalar
        ],
        out_specs=[
            pl.BlockSpec((TB, H), lambda b: (b, 0)),             # context, lane-dense
            pl.BlockSpec((TB, S), lambda b: (b, 0)),             # weights, lane-dense
        ],
    )

    ctx, attw2d = pl.pallas_call(
        _attention_kernel,
        out_shape=(
            jax.ShapeDtypeStruct((B_pad, H), dtype),
            jax.ShapeDtypeStruct((B_pad, S), dtype),
        ),
        grid_spec=grid_spec,
        compiler_params=pltpu.CompilerParams(
            dimension_semantics=("parallel",),
        ),
    )(x, w_row, b_smem)

    if B_pad != B:
        ctx = ctx[:B]
        attw2d = attw2d[:B]
    attention_weights = attw2d.reshape(B, S, 1)
    return ctx, attention_weights


def _reference(lstm_output, weight, bias):
    # Pure-JAX reference mirroring the PyTorch forward.
    scores = jnp.einsum("bsh,h->bs", lstm_output, weight[0]) + bias[0]  # (B, S)
    w = jax.nn.softmax(scores, axis=-1)[..., None]                      # (B, S, 1)
    ctx = jnp.sum(lstm_output * w, axis=1)                              # (B, H)
    return ctx, w


if __name__ == "__main__":
    B, S, H = 2, 8, 32
    key = jax.random.PRNGKey(0)
    k_x, k_w, k_b = jax.random.split(key, 3)

    lstm_output = jax.random.normal(k_x, (B, S, H), dtype=jnp.float32)

    # Deterministic init matching nn.Linear(hidden_size, 1) shapes:
    # weight (1, H), bias (1,), uniform(-1/sqrt(H), 1/sqrt(H)).
    bound = 1.0 / (H ** 0.5)
    weight = jax.random.uniform(k_w, (1, H), jnp.float32, -bound, bound)
    bias = jax.random.uniform(k_b, (1,), jnp.float32, -bound, bound)

    ctx, attw = attention_forward(lstm_output, weight, bias)
    jax.block_until_ready((ctx, attw))

    ctx_ref, attw_ref = _reference(lstm_output, weight, bias)
    assert ctx.shape == (B, H) and attw.shape == (B, S, 1)
    # Exact f32 softmax in-kernel; tolerance only covers reduction-order noise.
    assert jnp.allclose(ctx, ctx_ref, atol=1e-4, rtol=1e-4)
    assert jnp.allclose(attw, attw_ref, atol=1e-4, rtol=1e-4)
    # Weights sum to 1 along the sequence axis (exact divide in the softmax).
    assert jnp.allclose(jnp.sum(attw, axis=1), 1.0, atol=1e-4)

    print("KERNEL_OK")
</pallas_src>

<mosaic_0001>
module attributes {stable_mosaic.version = 11 : i64} {
  func.func @_attention_kernel(%arg0: i32, %arg1: memref<2x8x32xf32, #tpu.memory_space<vmem>>, %arg2: memref<1x32xf32, #tpu.memory_space<vmem>>, %arg3: memref<1x1xf32, #tpu.memory_space<smem>>, %arg4: memref<2x32xf32, #tpu.memory_space<vmem>>, %arg5: memref<2x8xf32, #tpu.memory_space<vmem>>) attributes {dimension_semantics = [#tpu.dimension_semantics<parallel>], iteration_bounds = array<i64: 1>, scalar_prefetch = 0 : i64, scratch_operands = 0 : i64, tpu.core_type = #tpu.core_type<tc>, window_params = [{transform_indices = @transform_0, window_bounds = array<i64: 2, 8, 32>}, {pipeline_mode = #tpu.pipeline_mode<synchronous>, transform_indices = @transform_1, window_bounds = array<i64: 1, 32>}, {transform_indices = @transform_2, window_bounds = array<i64: 1, 1>}, {transform_indices = @transform_3, window_bounds = array<i64: 2, 32>}, {transform_indices = @transform_4, window_bounds = array<i64: 2, 8>}]} {
    %c0 = arith.constant 0 : index
    %c0_0 = arith.constant 0 : index
    %c0_1 = arith.constant 0 : index
    %0 = vector.load %arg1[%c0, %c0_0, %c0_1] : memref<2x8x32xf32, #tpu.memory_space<vmem>>, vector<2x8x32xf32>
    %c0_2 = arith.constant 0 : index
    %c0_3 = arith.constant 0 : index
    %1 = vector.load %arg2[%c0_2, %c0_3] : memref<1x32xf32, #tpu.memory_space<vmem>>, vector<1x32xf32>
    %2 = vector.shape_cast %1 : vector<1x32xf32> to vector<1x1x32xf32>
    %c0_4 = arith.constant 0 : index
    %c0_5 = arith.constant 0 : index
    %3 = memref.load %arg3[%c0_4, %c0_5] : memref<1x1xf32, #tpu.memory_space<smem>>
    %4 = vector.broadcast %2 : vector<1x1x32xf32> to vector<2x8x32xf32>
    %5 = arith.mulf %0, %4 : vector<2x8x32xf32>
    %cst = arith.constant dense<0.000000e+00> : vector<2x8xf32>
    %6 = vector.multi_reduction <add>, %5, %cst [2] : vector<2x8x32xf32> to vector<2x8xf32>
    %7 = vector.shape_cast %6 : vector<2x8xf32> to vector<2x8x1xf32>
    %8 = vector.broadcast %3 : f32 to vector<2x8x1xf32>
    %9 = arith.addf %7, %8 : vector<2x8x1xf32>
    %cst_6 = arith.constant dense<0xFF800000> : vector<2x1xf32>
    %10 = vector.multi_reduction <maximumf>, %9, %cst_6 [1] : vector<2x8x1xf32> to vector<2x1xf32>
    %11 = vector.shape_cast %10 : vector<2x1xf32> to vector<2x1x1xf32>
    %12 = vector.broadcast %11 : vector<2x1x1xf32> to vector<2x8x1xf32>
    %13 = arith.subf %9, %12 : vector<2x8x1xf32>
    %14 = math.exp %13 : vector<2x8x1xf32>
    %cst_7 = arith.constant dense<0.000000e+00> : vector<2x1xf32>
    %15 = vector.multi_reduction <add>, %14, %cst_7 [1] : vector<2x8x1xf32> to vector<2x1xf32>
    %16 = vector.shape_cast %15 : vector<2x1xf32> to vector<2x1x1xf32>
    %17 = vector.broadcast %16 : vector<2x1x1xf32> to vector<2x8x1xf32>
    %18 = arith.divf %14, %17 : vector<2x8x1xf32>
    %19 = vector.broadcast %18 : vector<2x8x1xf32> to vector<2x8x32xf32>
    %20 = arith.mulf %0, %19 : vector<2x8x32xf32>
    %cst_8 = arith.constant dense<0.000000e+00> : vector<2x32xf32>
    %21 = vector.multi_reduction <add>, %20, %cst_8 [1] : vector<2x8x32xf32> to vector<2x32xf32>
    %c0_9 = arith.constant 0 : index
    %c0_10 = arith.constant 0 : index
    %22 = vector.load %arg4[%c0_9, %c0_10] : memref<2x32xf32, #tpu.memory_space<vmem>>, vector<2x32xf32>
    tpu.vector_store %arg4[%c0_9, %c0_10], %21 {strides = array<i32>} : memref<2x32xf32, #tpu.memory_space<vmem>>, vector<2x32xf32>,
    %23 = vector.shape_cast %18 : vector<2x8x1xf32> to vector<2x8xf32>
    %c0_11 = arith.constant 0 : index
    %c0_12 = arith.constant 0 : index
    %24 = vector.load %arg5[%c0_11, %c0_12] : memref<2x8xf32, #tpu.memory_space<vmem>>, vector<2x8xf32>
    tpu.vector_store %arg5[%c0_11, %c0_12], %23 {strides = array<i32>} : memref<2x8xf32, #tpu.memory_space<vmem>>, vector<2x8xf32>,
    return
  }
  func.func @transform_0(%arg0: i32) -> (i32, i32, i32) {
    %c0_i32 = arith.constant 0 : i32
    %c0_i32_0 = arith.constant 0 : i32
    %c0_i32_1 = arith.constant 0 : i32
    return %arg0, %c0_i32, %c0_i32_0 : i32, i32, i32
  }
  func.func @transform_1(%arg0: i32) -> (i32, i32) {
    %c0_i32 = arith.constant 0 : i32
    %c0_i32_0 = arith.constant 0 : i32
    %c0_i32_1 = arith.constant 0 : i32
    return %c0_i32, %c0_i32_0 : i32, i32
  }
  func.func @transform_2(%arg0: i32) -> (i32, i32) {
    %c0_i32 = arith.constant 0 : i32
    %c0_i32_0 = arith.constant 0 : i32
    %c0_i32_1 = arith.constant 0 : i32
    return %c0_i32, %c0_i32_0 : i32, i32
  }
  func.func @transform_3(%arg0: i32) -> (i32, i32) {
    %c0_i32 = arith.constant 0 : i32
    %c0_i32_0 = arith.constant 0 : i32
    return %arg0, %c0_i32 : i32, i32
  }
  func.func @transform_4(%arg0: i32) -> (i32, i32) {
    %c0_i32 = arith.constant 0 : i32
    %c0_i32_0 = arith.constant 0 : i32
    return %arg0, %c0_i32 : i32, i32
  }
}

</mosaic_0001>

<llo_original>
// kernel: tpu_custom_call.1
$region0: #{tpu_custom_call.1}
  #allocation0 [shape = 'u32[]', space=smem, size = 0x4, offset = 0x4, fixed_abs, tag = 'smem constant byte address 0x4 - core index']
  #allocation1 [shape = 'u32[144,128]{1,0:T(1,128)}', space=vmem, size = 0x12000, scoped, tag = 'internal scratch']
  #allocation2 [shape = 'f32[1,1]{1,0:T(1,128)S(6)}', space=smem, size = 0x200, scoped, tag = 'scoped memory for tpu_custom_call.1']
  %s0 = inlined_call_operand.hbm [shape: f32[2,8,32], index: 0, kind: input, shape index: {}]
  %s1 = inlined_call_operand.vmem [shape: f32[1,32], index: 1, kind: input, shape index: {}]
  %s2 = inlined_call_operand.<no memory space> [shape: f32[1,1], index: 2, kind: input, shape index: {}]
  %s3 = inlined_call_operand.hbm [shape: f32[2,32], index: 3, kind: output, shape index: {0}]
  %s4 = inlined_call_operand.hbm [shape: f32[2,8], index: 4, kind: output, shape index: {1}]
  %5 = xla_tuple %s3, %s4
  %s6 = sld [smem:[#allocation0]]
  $region34: #{tpu_custom_call.1} parent=0
    _
  %s8 = ssub.s32 1, %s6
  %s9 = scalar_select 0, %s8, %s6
  %10 = sst [smem:[#allocation2]] %s2
  $region1: #{tpu_custom_call.1} parent=0
    #allocation3 [shape = 'u8[8192]{0}', space=vmem, size = 0x2000, scoped, tag = 'input window, operand 0, single buffered']
    #allocation4 [shape = 's32[1]{0}', space=sflag, size = 0x4, scoped, tag = 'scoped memory for tpu_custom_call.1']
    #allocation5 [shape = 's32[1]{0}', space=sflag, size = 0x4, scoped, tag = 'scoped memory for tpu_custom_call.1']
    #allocation6 [shape = 'u8[1024]{0}', space=vmem, size = 0x400, scoped, tag = 'output window, operand 0, single buffered']
    #allocation7 [shape = 'u8[1024]{0}', space=vmem, size = 0x400, scoped, tag = 'output window, operand 1, single buffered']
    #allocation8 [shape = 's32[1]{0}', space=sflag, size = 0x4, scoped, tag = 'scoped memory for tpu_custom_call.1']
    %11 = vsyncpa [#allocation4], 0
    %12 = vsyncpa [#allocation5], 0
    %13 = vsyncpa [#allocation8], 0
    // Predicated region
    $region2: #{tpu_custom_call.1} parent=1 // pred_check
      _
    $region3: #{tpu_custom_call.1} parent=1 // pred_check_branch
      %15 = sbr.rel (0) target = $region5
    $region4: #{tpu_custom_call.1} parent=1 // pred_region
      %s17 = ssub.s32 256, 256
      %18 = vsyncadd [#allocation4], %s17
      %s19 = sshll.u32 [#allocation3], 4
      %s20 = int_to_ptr.vmem [resolvable:$true] %s19
      %25 = dma.hbm_to_vmem [thread:$0]  %s0, 256, %s20, [#allocation4], 128, 128, 8
    $region5: #{tpu_custom_call.1} parent=1 // pred_fallthru
      _
    // Predicated region
    $region6: #{tpu_custom_call.1} parent=1 // pred_check
      _
    $region7: #{tpu_custom_call.1} parent=1 // pred_check_branch
      %27 = sbr.rel (0) target = $region9
    $region8: #{tpu_custom_call.1} parent=1 // pred_region
      _
    $region9: #{tpu_custom_call.1} parent=1 // pred_fallthru
      _
    // Predicated region
    $region10: #{tpu_custom_call.1} parent=1 // pred_check
      _
    $region11: #{tpu_custom_call.1} parent=1 // pred_check_branch
      %29 = sbr.rel (0) target = $region13
    $region12: #{tpu_custom_call.1} parent=1 // pred_region
      _
    $region13: #{tpu_custom_call.1} parent=1 // pred_fallthru
      _
    // Predicated region
    $region14: #{tpu_custom_call.1} parent=1 // pred_check
      _
    $region15: #{tpu_custom_call.1} parent=1 // pred_check_branch
      %31 = sbr.rel (0) target = $region17
    $region16: #{tpu_custom_call.1} parent=1 // pred_region
      %32 = dma.done [#allocation4], 256
    $region17: #{tpu_custom_call.1} parent=1 // pred_fallthru
      _
    %v33 = vld [vmem:[#allocation3] sm:$0xff]
    %v34 = vld [vmem:[#allocation3 + $0x8] sm:$0xff]
    %v35 = vld [vmem:[%s1] sm:$0x1]
    %s36 = sld [smem:[#allocation2]]
    %v38 = vlaneseq
    %v39 = vshrl.u32 %v38, 7
    %v40 = vsub.s32 0, %v39
    %v41 = vrot.slane %v35, %v40
    %v43 = vmul.f32 %v33, %v41
    %v44 = vmul.f32 %v34, %v41
    %vm45 = vcmask 261120
    %v46 = vsel %vm45, %v43, 0.0
    %47 = vadd.xlane.f32.xlu0 %v46
    %v48 = vpop.xlane.xlu0 %47
    %v49 = vsel %vm45, %v44, 0.0
    %50 = vadd.xlane.f32.xlu0 %v49
    %v51 = vpop.xlane.xlu0 %50
    %v52 = vstv %s36
    %v53 = vadd.f32 %v48, %v52
    %v54 = vadd.f32 %v51, %v52
    %v55 = vrot.slane %v53, 4
    %v56 = vmax.f32 %v53, %v55
    %v57 = vrot.slane %v56, 2
    %v58 = vmax.f32 %v56, %v57
    %v59 = vrot.slane %v58, 1
    %v60 = vmax.f32 %v58, %v59
    %v61 = vrot.slane %v54, 4
    %v62 = vmax.f32 %v54, %v61
    %v63 = vrot.slane %v62, 2
    %v64 = vmax.f32 %v62, %v63
    %v65 = vrot.slane %v64, 1
    %v66 = vmax.f32 %v64, %v65
    %v67 = vsub.f32 %v53, %v60
    %v68 = vsub.f32 %v54, %v66
    %v69 = vmul.f32 %v67, 1.442695
    %v70 = vpow.pop %v69
    %v71 = vmul.f32 %v68, 1.442695
    %v72 = vpow.pop %v71
    %v73 = vrot.slane %v70, 4
    %v74 = vadd.f32 %v70, %v73
    %v75 = vrot.slane %v74, 2
    %v76 = vadd.f32 %v74, %v75
    %v77 = vrot.slane %v76, 1
    %v78 = vadd.f32 %v76, %v77
    %v79 = vrot.slane %v72, 4
    %v80 = vadd.f32 %v72, %v79
    %v81 = vrot.slane %v80, 2
    %v82 = vadd.f32 %v80, %v81
    %v83 = vrot.slane %v82, 1
    %v84 = vadd.f32 %v82, %v83
    %v85 = vrcp.pop %v78
    %v86 = vmul.f32 %v70, %v85
    %v87 = vrcp.pop %v84
    %v88 = vmul.f32 %v72, %v87
    %v89 = vmul.f32 %v33, %v86
    %v90 = vmul.f32 %v34, %v88
    %v91 = vsel %vm45, %v89, 0.0
    %v92 = vrot.slane %v91, 4
    %v93 = vadd.f32 %v91, %v92
    %v94 = vrot.slane %v93, 2
    %v95 = vadd.f32 %v93, %v94
    %v96 = vrot.slane %v95, 1
    %v97 = vadd.f32 %v95, %v96
    %v98 = vsel %vm45, %v90, 0.0
    %v99 = vrot.slane %v98, 4
    %v100 = vadd.f32 %v98, %v99
    %v101 = vrot.slane %v100, 2
    %v102 = vadd.f32 %v100, %v101
    %v103 = vrot.slane %v102, 1
    %v104 = vadd.f32 %v102, %v103
    %vm107 = vcmask 1041409
    %v108 = vsel %vm107, %v104, %v97
    %vm110 = vcmask 254976
    %111 = vst.msk [vmem:[#allocation6] sm:$0x3] %vm110, %v108
    %v114 = vlaneseq
    %v115 = vand.u32 %v114, 127
    %v116 = vlaneseq
    %v117 = vshrl.u32 %v116, 7
    %v118 = vsub.s32 %v115, %v117
    %v119 = vrot.slane %v86, %v118
    %v120 = vlaneseq
    %v121 = vshrl.u32 %v120, 7
    %v122 = vsub.s32 %v115, %v121
    %v123 = vrot.slane %v88, %v122
    %v124 = vsel %vm107, %v123, %v119
    %vm126 = vcmask 58368
    %127 = vst.msk [vmem:[#allocation7] sm:$0x3] %vm126, %v124
    // Predicated region
    $region18: #{tpu_custom_call.1} parent=1 // pred_check
      _
    $region19: #{tpu_custom_call.1} parent=1 // pred_check_branch
      %129 = sbr.rel (0) target = $region21
    $region20: #{tpu_custom_call.1} parent=1 // pred_region
      %s131 = ssub.s32 32, 32
      %132 = vsyncadd [#allocation5], %s131
      %s134 = sshll.u32 [#allocation6], 4
      %s135 = int_to_ptr.vmem [resolvable:$true] %s134
      %137 = dma.vmem_to_hbm [thread:$0]  %s135, 32, %s3, [#allocation5]
    $region21: #{tpu_custom_call.1} parent=1 // pred_fallthru
      _
    // Predicated region
    $region22: #{tpu_custom_call.1} parent=1 // pred_check
      _
    $region23: #{tpu_custom_call.1} parent=1 // pred_check_branch
      %139 = sbr.rel (0) target = $region25
    $region24: #{tpu_custom_call.1} parent=1 // pred_region
      %s141 = ssub.s32 32, 32
      %142 = vsyncadd [#allocation8], %s141
      %s144 = sshll.u32 [#allocation7], 4
      %s145 = int_to_ptr.vmem [resolvable:$true] %s144
      %147 = dma.vmem_to_hbm [thread:$0]  %s145, 32, %s4, [#allocation8]
    $region25: #{tpu_custom_call.1} parent=1 // pred_fallthru
      _
    // Predicated region
    $region26: #{tpu_custom_call.1} parent=1 // pred_check
      _
    $region27: #{tpu_custom_call.1} parent=1 // pred_check_branch
      %149 = sbr.rel (0) target = $region29
    $region28: #{tpu_custom_call.1} parent=1 // pred_region
      %150 = dma.done [#allocation5], 32
    $region29: #{tpu_custom_call.1} parent=1 // pred_fallthru
      _
    // Predicated region
    $region30: #{tpu_custom_call.1} parent=1 // pred_check
      _
    $region31: #{tpu_custom_call.1} parent=1 // pred_check_branch
      %152 = sbr.rel (0) target = $region33
    $region32: #{tpu_custom_call.1} parent=1 // pred_region
      %153 = dma.done [#allocation8], 32
    $region33: #{tpu_custom_call.1} parent=1 // pred_fallthru
      _
    %154 = vsyncpa [#allocation4], 1
    %155 = vsyncpa [#allocation5], 1
    %156 = vsyncpa [#allocation8], 1

</llo_original>
